<compile_context>
chip_gen: v6e
topology: v6e:2x2x1
jax: 0.10.0
libtpu: 0.0.40
codegen_flags: <defaults>
</compile_context>

<pallas_src>
import jax
import jax.numpy as jnp
from jax import lax
from jax.experimental import pallas as pl
from jax.experimental.pallas import tpu as pltpu


def odefunc_kernel(xwt_ref, a_ref, b_ref, ot_ref):
    # xwt_ref : (th, N)  row tile of xw^T = (x @ W^T)^T
    # a_ref   : (N, N)   full adjacency A
    # b_ref   : (th, 1)  bias slice (column vector)
    # ot_ref  : (th, N)  output tile of o^T (lane-dense: last dim = N)
    #
    # o^T[h, n] = sum_m xw^T[h, m] * A[n, m]  -- contraction over the node dim
    # of BOTH operands, so no transpose of A is materialised in the kernel.
    ot = lax.dot_general(
        xwt_ref[...], a_ref[...],
        dimension_numbers=(((1,), (1,)), ((), ())),
        preferred_element_type=jnp.float32,
    )
    ot = ot + b_ref[...]                       # bias broadcast over nodes
    # dropout(p=0.0) is the identity (module default / eval mode).
    # TODO(synk): training-mode dropout (p>0) would need pltpu.prng_* masking.
    ot_ref[...] = jnp.maximum(ot, 0.0).astype(ot_ref.dtype)


def _default_h_tiles(H):
    """1 grid step on v5e/v6e (1 TensorCore); 2 parallel steps on v7x (2 TCs)."""
    try:
        kind = jax.devices()[0].device_kind.lower()
    except Exception:
        kind = ""
    n = 2 if "v7" in kind else 1
    if H % (8 * n) != 0:        # keep sublane alignment of the (th, N) blocks
        n = 1
    return n


def odefunc_forward(A, x, W, b, *, h_tiles=None):
    """relu(A @ (x @ W^T) + b), with the O(N^2*H) diffusion matmul in Pallas."""
    N, H = x.shape
    assert A.shape == (N, N) and W.shape == (H, H) and b.shape == (H,)
    # N multiple of 128 keeps output stores lane-dense; H multiple of 8 keeps
    # the (th, N) blocks sublane-aligned.
    assert N % 128 == 0 and H % 8 == 0, "shapes must be TPU-tile aligned"

    if h_tiles is None:
        h_tiles = _default_h_tiles(H)
    assert H % h_tiles == 0
    th = H // h_tiles

    # Reassociate: (A @ x) @ W^T == A @ (x @ W^T).  xw^T = W @ x^T is only
    # O(N*H^2) work (vs O(N^2*H) for the graph diffusion kept in the kernel),
    # so the badly shaped K=H=32 contraction is hoisted off the per-tile path.
    xwT = jnp.dot(W, x.T)          # (H, N)
    b_col = b.reshape(H, 1)        # (H, 1)

    oT = pl.pallas_call(
        odefunc_kernel,
        out_shape=jax.ShapeDtypeStruct((H, N), x.dtype),
        grid_spec=pltpu.PrefetchScalarGridSpec(
            num_scalar_prefetch=0,
            grid=(h_tiles,),
            in_specs=[
                pl.BlockSpec((th, N), lambda i: (i, 0)),   # xw^T row tile
                pl.BlockSpec((N, N), lambda i: (0, 0)),    # full A (resident)
                pl.BlockSpec((th, 1), lambda i: (i, 0)),   # bias slice
            ],
            out_specs=pl.BlockSpec((th, N), lambda i: (i, 0)),
        ),
        compiler_params=pltpu.CompilerParams(
            dimension_semantics=("parallel",)),
    )(xwT, A, b_col)

    return oT.T                    # back to the PyTorch (N_node, hidden) layout


def odefunc_ref(A, x, W, b):
    return jnp.maximum(jnp.dot(jnp.dot(A, x), W.T) + b[None, :], 0.0)


if __name__ == "__main__":
    N_NODE = 128      # number of graph nodes
    HIDDEN = 32       # hidden_size

    key = jax.random.PRNGKey(0)
    k_a, k_x, k_w, k_b = jax.random.split(key, 4)

    A = jax.random.normal(k_a, (N_NODE, N_NODE), dtype=jnp.float32) / jnp.sqrt(N_NODE)
    x = jax.random.normal(k_x, (N_NODE, HIDDEN), dtype=jnp.float32)
    # nn.Linear(hidden, hidden): weight (H, H), bias (H,)
    W = jax.random.uniform(k_w, (HIDDEN, HIDDEN), dtype=jnp.float32,
                           minval=-1.0 / jnp.sqrt(HIDDEN), maxval=1.0 / jnp.sqrt(HIDDEN))
    b = jax.random.uniform(k_b, (HIDDEN,), dtype=jnp.float32,
                           minval=-1.0 / jnp.sqrt(HIDDEN), maxval=1.0 / jnp.sqrt(HIDDEN))

    out = odefunc_forward(A, x, W, b)
    out = jax.block_until_ready(out)

    ref = odefunc_ref(A, x, W, b)
    assert out.shape == (N_NODE, HIDDEN)
    assert jnp.allclose(out, ref, atol=1e-4, rtol=1e-4), "mismatch vs reference"

    print("KERNEL_OK")
</pallas_src>

<mosaic_0001>
module attributes {stable_mosaic.version = 11 : i64} {
  func.func @odefunc_kernel(%arg0: i32, %arg1: memref<32x128xf32, #tpu.memory_space<vmem>>, %arg2: memref<128x128xf32, #tpu.memory_space<vmem>>, %arg3: memref<32x1xf32, #tpu.memory_space<vmem>>, %arg4: memref<32x128xf32, #tpu.memory_space<vmem>>) attributes {dimension_semantics = [#tpu.dimension_semantics<parallel>], iteration_bounds = array<i64: 1>, scalar_prefetch = 0 : i64, scratch_operands = 0 : i64, tpu.core_type = #tpu.core_type<tc>, window_params = [{transform_indices = @transform_0, window_bounds = array<i64: 32, 128>}, {pipeline_mode = #tpu.pipeline_mode<synchronous>, transform_indices = @transform_1, window_bounds = array<i64: 128, 128>}, {transform_indices = @transform_2, window_bounds = array<i64: 32, 1>}, {transform_indices = @transform_3, window_bounds = array<i64: 32, 128>}]} {
    %c0 = arith.constant 0 : index
    %c0_0 = arith.constant 0 : index
    %0 = vector.load %arg1[%c0, %c0_0] : memref<32x128xf32, #tpu.memory_space<vmem>>, vector<32x128xf32>
    %c0_1 = arith.constant 0 : index
    %c0_2 = arith.constant 0 : index
    %1 = vector.load %arg2[%c0_1, %c0_2] : memref<128x128xf32, #tpu.memory_space<vmem>>, vector<128x128xf32>
    %cst = arith.constant dense<0.000000e+00> : vector<32x128xf32>
    %2 = tpu.matmul %0, %1, %cst {dimension_numbers = #tpu.dot_dimension_numbers<[1], [1], [0], [0], [0, 0, 1, 0], [], []>} : vector<32x128xf32>, vector<128x128xf32>, vector<32x128xf32> -> vector<32x128xf32>
    %c0_3 = arith.constant 0 : index
    %c0_4 = arith.constant 0 : index
    %3 = vector.load %arg3[%c0_3, %c0_4] : memref<32x1xf32, #tpu.memory_space<vmem>>, vector<32x1xf32>
    %4 = vector.broadcast %3 : vector<32x1xf32> to vector<32x128xf32>
    %5 = arith.addf %2, %4 : vector<32x128xf32>
    %cst_5 = arith.constant 0.000000e+00 : f32
    %6 = vector.broadcast %cst_5 : f32 to vector<32x128xf32>
    %7 = arith.maximumf %5, %6 : vector<32x128xf32>
    %c0_6 = arith.constant 0 : index
    %c0_7 = arith.constant 0 : index
    %8 = vector.load %arg4[%c0_6, %c0_7] : memref<32x128xf32, #tpu.memory_space<vmem>>, vector<32x128xf32>
    tpu.vector_store %arg4[%c0_6, %c0_7], %7 {strides = array<i32>} : memref<32x128xf32, #tpu.memory_space<vmem>>, vector<32x128xf32>,
    return
  }
  func.func @transform_0(%arg0: i32) -> (i32, i32) {
    %c0_i32 = arith.constant 0 : i32
    %c0_i32_0 = arith.constant 0 : i32
    return %arg0, %c0_i32 : i32, i32
  }
  func.func @transform_1(%arg0: i32) -> (i32, i32) {
    %c0_i32 = arith.constant 0 : i32
    %c0_i32_0 = arith.constant 0 : i32
    %c0_i32_1 = arith.constant 0 : i32
    return %c0_i32, %c0_i32_0 : i32, i32
  }
  func.func @transform_2(%arg0: i32) -> (i32, i32) {
    %c0_i32 = arith.constant 0 : i32
    %c0_i32_0 = arith.constant 0 : i32
    return %arg0, %c0_i32 : i32, i32
  }
  func.func @transform_3(%arg0: i32) -> (i32, i32) {
    %c0_i32 = arith.constant 0 : i32
    %c0_i32_0 = arith.constant 0 : i32
    return %arg0, %c0_i32 : i32, i32
  }
}

</mosaic_0001>

<llo_original>
// kernel: tpu_custom_call.1
$region0: #{tpu_custom_call.1}
  #allocation0 [shape = 'u32[]', space=smem, size = 0x4, offset = 0x4, fixed_abs, tag = 'smem constant byte address 0x4 - core index']
  #allocation1 [shape = 'u32[144,128]{1,0:T(1,128)}', space=vmem, size = 0x12000, scoped, tag = 'internal scratch']
  %s0 = inlined_call_operand.vmem [shape: f32[32,128], index: 0, kind: input, shape index: {}]
  %s1 = inlined_call_operand.hbm [shape: f32[128,128], index: 1, kind: input, shape index: {}]
  %s2 = inlined_call_operand.vmem [shape: f32[32,1], index: 2, kind: input, shape index: {}]
  %s3 = inlined_call_operand.hbm [shape: f32[32,128], index: 3, kind: output, shape index: {}]
  %s4 = sld [smem:[#allocation0]]
  $region26: #{tpu_custom_call.1} parent=0
    _
  %s6 = ssub.s32 1, %s4
  %s7 = scalar_select 0, %s6, %s4
  $region1: #{tpu_custom_call.1} parent=0
    #allocation2 [shape = 'u8[65536]{0}', space=vmem, size = 0x10000, scoped, tag = 'input window, operand 1, single buffered']
    #allocation3 [shape = 's32[1]{0}', space=sflag, size = 0x4, scoped, tag = 'scoped memory for tpu_custom_call.1']
    #allocation4 [shape = 's32[1]{0}', space=sflag, size = 0x4, scoped, tag = 'scoped memory for tpu_custom_call.1']
    #allocation5 [shape = 'u8[16384]{0}', space=vmem, size = 0x4000, scoped, tag = 'output window, operand 0, single buffered']
    %8 = vsyncpa [#allocation3], 0
    %9 = vsyncpa [#allocation4], 0
    // Predicated region
    $region2: #{tpu_custom_call.1} parent=1 // pred_check
      _
    $region3: #{tpu_custom_call.1} parent=1 // pred_check_branch
      %11 = sbr.rel (0) target = $region5
    $region4: #{tpu_custom_call.1} parent=1 // pred_region
      _
    $region5: #{tpu_custom_call.1} parent=1 // pred_fallthru
      _
    // Predicated region
    $region6: #{tpu_custom_call.1} parent=1 // pred_check
      _
    $region7: #{tpu_custom_call.1} parent=1 // pred_check_branch
      %13 = sbr.rel (0) target = $region9
    $region8: #{tpu_custom_call.1} parent=1 // pred_region
      %s15 = ssub.s32 2048, 2048
      %16 = vsyncadd [#allocation3], %s15
      %s17 = sshll.u32 [#allocation2], 4
      %s18 = int_to_ptr.vmem [resolvable:$true] %s17
      %23 = dma.hbm_to_vmem [thread:$0]  %s1, 2048, %s18, [#allocation3], 128, 128, 8
    $region9: #{tpu_custom_call.1} parent=1 // pred_fallthru
      _
    // Predicated region
    $region10: #{tpu_custom_call.1} parent=1 // pred_check
      _
    $region11: #{tpu_custom_call.1} parent=1 // pred_check_branch
      %25 = sbr.rel (0) target = $region13
    $region12: #{tpu_custom_call.1} parent=1 // pred_region
      _
    $region13: #{tpu_custom_call.1} parent=1 // pred_fallthru
      _
    // Predicated region
    $region14: #{tpu_custom_call.1} parent=1 // pred_check
      _
    $region15: #{tpu_custom_call.1} parent=1 // pred_check_branch
      %27 = sbr.rel (0) target = $region17
    $region16: #{tpu_custom_call.1} parent=1 // pred_region
      %28 = dma.done [#allocation3], 2048
    $region17: #{tpu_custom_call.1} parent=1 // pred_fallthru
      _
    %v29 = vld [vmem:[%s0] sm:$0xff]
    %v30 = vld [vmem:[%s0 + $0x8] sm:$0xff]
    %v31 = vld [vmem:[%s0 + $0x10] sm:$0xff]
    %v32 = vld [vmem:[%s0 + $0x18] sm:$0xff]
    %v33 = vld [vmem:[#allocation2] sm:$0xff]
    %v34 = vld [vmem:[#allocation2 + $0x8] sm:$0xff]
    %v35 = vld [vmem:[#allocation2 + $0x10] sm:$0xff]
    %v36 = vld [vmem:[#allocation2 + $0x18] sm:$0xff]
    %v37 = vld [vmem:[#allocation2 + $0x20] sm:$0xff]
    %v38 = vld [vmem:[#allocation2 + $0x28] sm:$0xff]
    %v39 = vld [vmem:[#allocation2 + $0x30] sm:$0xff]
    %v40 = vld [vmem:[#allocation2 + $0x38] sm:$0xff]
    %v41 = vld [vmem:[#allocation2 + $0x40] sm:$0xff]
    %v42 = vld [vmem:[#allocation2 + $0x48] sm:$0xff]
    %v43 = vld [vmem:[#allocation2 + $0x50] sm:$0xff]
    %v44 = vld [vmem:[#allocation2 + $0x58] sm:$0xff]
    %v45 = vld [vmem:[#allocation2 + $0x60] sm:$0xff]
    %v46 = vld [vmem:[#allocation2 + $0x68] sm:$0xff]
    %v47 = vld [vmem:[#allocation2 + $0x70] sm:$0xff]
    %v48 = vld [vmem:[#allocation2 + $0x78] sm:$0xff]
    %v49 = vld [vmem:[%s2] sm:$0xff]
    %v50 = vld [vmem:[%s2 + $0x8] sm:$0xff]
    %v51 = vld [vmem:[%s2 + $0x10] sm:$0xff]
    %v52 = vld [vmem:[%s2 + $0x18] sm:$0xff]
    %54 = vset.pattern.permute.xlu0 0
    %55 = vperm.xlu0 %54, %v49
    %v56 = vpop.permute.xlu0 %55
    %59 = vset.pattern.permute.xlu0 0
    %60 = vperm.xlu0 %59, %v50
    %v61 = vpop.permute.xlu0 %60
    %64 = vset.pattern.permute.xlu0 0
    %65 = vperm.xlu0 %64, %v51
    %v66 = vpop.permute.xlu0 %65
    %69 = vset.pattern.permute.xlu0 0
    %70 = vperm.xlu0 %69, %v52
    %v71 = vpop.permute.xlu0 %70
    %73 = vmatprep.subr.mxu0 0.0
    %74 = vmatpush1.xpose.msra.mxu0 %v48
    %75 = vmatprep.subr.mxu0 0.0
    %76 = vmatpush1.xpose.msra.mxu0 %v47
    %77 = vmatprep.subr.mxu0 0.0
    %78 = vmatpush1.xpose.msra.mxu0 %v46
    %79 = vmatprep.subr.mxu0 0.0
    %80 = vmatpush1.xpose.msra.mxu0 %v45
    %81 = vmatprep.subr.mxu0 0.0
    %82 = vmatpush1.xpose.msra.mxu0 %v44
    %83 = vmatprep.subr.mxu0 0.0
    %84 = vmatpush1.xpose.msra.mxu0 %v43
    %85 = vmatprep.subr.mxu0 0.0
    %86 = vmatpush1.xpose.msra.mxu0 %v42
    %87 = vmatprep.subr.mxu0 0.0
    %88 = vmatpush1.xpose.msra.mxu0 %v41
    %89 = vmatprep.subr.mxu0 0.0
    %90 = vmatpush1.xpose.msra.mxu0 %v40
    %91 = vmatprep.subr.mxu0 0.0
    %92 = vmatpush1.xpose.msra.mxu0 %v39
    %93 = vmatprep.subr.mxu0 0.0
    %94 = vmatpush1.xpose.msra.mxu0 %v38
    %95 = vmatprep.subr.mxu0 0.0
    %96 = vmatpush1.xpose.msra.mxu0 %v37
    %97 = vmatprep.subr.mxu0 0.0
    %98 = vmatpush1.xpose.msra.mxu0 %v36
    %99 = vmatprep.subr.mxu0 0.0
    %100 = vmatpush1.xpose.msra.mxu0 %v35
    %101 = vmatprep.subr.mxu0 0.0
    %102 = vmatpush1.xpose.msra.mxu0 %v34
    %103 = vmatprep.subr.mxu0 0.0
    %104 = vmatpush1.xpose.msra.mxu0 %v33
    %105 = vmatprep.subr.mxu0 0.0
    %106 = vmatpush2.xpose.msra.mxu0 0.0
    %107 = vmatprep.subr.mxu0 0.0
    %108 = vmatpush2.xpose.msra.mxu0 0.0
    %109 = vmatprep.subr.mxu0 0.0
    %110 = vmatpush2.xpose.msra.mxu0 0.0
    %111 = vmatprep.subr.mxu0 0.0
    %112 = vmatpush2.xpose.msra.mxu0 0.0
    %113 = vmatprep.subr.mxu0 0.0
    %114 = vmatpush2.xpose.msra.mxu0 0.0
    %115 = vmatprep.subr.mxu0 0.0
    %116 = vmatpush2.xpose.msra.mxu0 0.0
    %117 = vmatprep.subr.mxu0 0.0
    %118 = vmatpush2.xpose.msra.mxu0 0.0
    %119 = vmatprep.subr.mxu0 0.0
    %120 = vmatpush2.xpose.msra.mxu0 0.0
    %121 = vmatprep.subr.mxu0 0.0
    %122 = vmatpush2.xpose.msra.mxu0 0.0
    %123 = vmatprep.subr.mxu0 0.0
    %124 = vmatpush2.xpose.msra.mxu0 0.0
    %125 = vmatprep.subr.mxu0 0.0
    %126 = vmatpush2.xpose.msra.mxu0 0.0
    %127 = vmatprep.subr.mxu0 0.0
    %128 = vmatpush2.xpose.msra.mxu0 0.0
    %129 = vmatprep.subr.mxu0 0.0
    %130 = vmatpush2.xpose.msra.mxu0 0.0
    %131 = vmatprep.subr.mxu0 0.0
    %132 = vmatpush2.xpose.msra.mxu0 0.0
    %133 = vmatprep.subr.mxu0 0.0
    %134 = vmatpush2.xpose.msra.mxu0 0.0
    %135 = vmatprep.subr.mxu0 0.0
    %136 = vmatpush2.xpose.msra.mxu0 0.0
    %137 = vmatprep.mubr.f32.mxu0 0.0
    %138 = vmatmul.mubr.f32.gmra.mxu0 %v29
    %v139 = vpop.f32.mrf.mxu0
    %v140 = vadd.f32 %v56, %v139
    %v141 = vpop.f32.mrf.mxu0
    %142 = vmatprep.mubr.f32.mxu0 0.0
    %143 = vmatmul.mubr.f32.gmra.mxu0 %v30
    %v144 = vpop.f32.mrf.mxu0
    %v145 = vadd.f32 %v61, %v144
    %v146 = vpop.f32.mrf.mxu0
    %147 = vmatprep.mubr.f32.mxu0 0.0
    %148 = vmatmul.mubr.f32.gmra.mxu0 %v31
    %v149 = vpop.f32.mrf.mxu0
    %v150 = vadd.f32 %v66, %v149
    %v151 = vpop.f32.mrf.mxu0
    %152 = vmatprep.mubr.f32.mxu0 0.0
    %153 = vmatmul.mubr.f32.gmra.mxu0 %v32
    %v154 = vpop.f32.mrf.mxu0
    %v155 = vadd.f32 %v71, %v154
    %v156 = vpop.f32.mrf.mxu0
    %157 = vdwg.mxu0
    %v158 = vmax.f32 %v140, 0.0
    %v159 = vmax.f32 %v145, 0.0
    %v160 = vmax.f32 %v150, 0.0
    %v161 = vmax.f32 %v155, 0.0
    %162 = vst [vmem:[#allocation5] sm:$0xff] %v158
    %163 = vst [vmem:[#allocation5 + $0x8] sm:$0xff] %v159
    %164 = vst [vmem:[#allocation5 + $0x10] sm:$0xff] %v160
    %165 = vst [vmem:[#allocation5 + $0x18] sm:$0xff] %v161
    // Predicated region
    $region18: #{tpu_custom_call.1} parent=1 // pred_check
      _
    $region19: #{tpu_custom_call.1} parent=1 // pred_check_branch
      %167 = sbr.rel (0) target = $region21
    $region20: #{tpu_custom_call.1} parent=1 // pred_region
      %s169 = ssub.s32 512, 512
      %170 = vsyncadd [#allocation4], %s169
      %s171 = sshll.u32 [#allocation5], 4
      %s172 = int_to_ptr.vmem [resolvable:$true] %s171
      %177 = dma.vmem_to_hbm [thread:$0]  %s172, 512, %s3, [#allocation4], 128, 128, 8
    $region21: #{tpu_custom_call.1} parent=1 // pred_fallthru
      _
    // Predicated region
    $region22: #{tpu_custom_call.1} parent=1 // pred_check
      _
    $region23: #{tpu_custom_call.1} parent=1 // pred_check_branch
      %179 = sbr.rel (0) target = $region25
    $region24: #{tpu_custom_call.1} parent=1 // pred_region
      %180 = dma.done [#allocation4], 512
    $region25: #{tpu_custom_call.1} parent=1 // pred_fallthru
      _
    %181 = vsyncpa [#allocation3], 1
    %182 = vsyncpa [#allocation4], 1

</llo_original>
